<compile_context>
chip_gen: v5e
topology: v5e:2x2
jax: 0.10.0
libtpu: 0.0.40
codegen_flags: <defaults>
</compile_context>

<pallas_src>
import functools

import jax
import jax.numpy as jnp
from jax.experimental import pallas as pl
from jax.experimental.pallas import tpu as pltpu

_MiB = 1024 * 1024


def _patch_embed_kernel(x_ref, w_ref, b_ref, o_ref):
    # x_ref: (tm, Kp) bf16 | w_ref: (Kp, Np) bf16 | b_ref: (1, Np) f32 | o_ref: (tm, Np)
    acc = jnp.dot(x_ref[...], w_ref[...], preferred_element_type=jnp.float32)
    o_ref[...] = (acc + b_ref[...]).astype(o_ref.dtype)


def _round_up(x, m):
    return ((x + m - 1) // m) * m


def _vmem_limits():
    """Per-generation VMEM limit + tile-footprint budget.

    v7x has only 64 MiB per TensorCore, v5e/v6e have 128 MiB.  Leave headroom
    for Mosaic internal scratch / semaphores / the f32 matmul result buffer.
    """
    try:
        phys = int(pltpu.get_tpu_info().vmem_capacity_bytes)
    except Exception:
        phys = 64 * _MiB  # conservative fallback (v7x per-TC size)
    limit = max(32 * _MiB, int(phys * 0.80))   # ~51 MiB on v7x, ~102 MiB v5e/v6e
    budget = max(24 * _MiB, int(phys * 0.60))  # what the tiles themselves may use
    return limit, budget


def _choose_row_tile(m, k_pad, n_pad, in_bytes, out_bytes, budget_bytes,
                     min_steps=4):
    """Largest row tile whose VMEM footprint fits the budget.

    Footprint model:
      * weight + bias blocks: single-buffered (grid-invariant, Buffered(1))
      * X block and output block: double-buffered by the pipeline
      * one (tm, n_pad) f32 matmul accumulator (Mosaic internal scratch)
    Also requires >= min_steps grid steps (2 per TensorCore on v7x) so the
    input DMA of step i+1 overlaps the MXU work of step i.
    """
    if m <= 8:
        return m
    fixed = k_pad * n_pad * in_bytes + n_pad * 4          # 1x weight + 1x bias
    tm = 8
    for cand in (2048, 1024, 512, 256, 128, 64, 32, 16, 8):
        if cand > m:
            continue
        per_tile = (2 * cand * (k_pad * in_bytes + n_pad * out_bytes)  # X + out
                    + cand * n_pad * 4)                                # f32 acc
        if fixed + per_tile <= budget_bytes:
            tm = cand
            break
    while tm > 8 and pl.cdiv(m, tm) < min_steps:
        tm //= 2
    return tm


def _resident_spec(block_shape, index_map):
    """Single-buffered BlockSpec for grid-invariant operands; falls back to a
    plain (double-buffered) BlockSpec if this JAX lacks pipeline_mode."""
    try:
        return pl.BlockSpec(block_shape, index_map,
                            pipeline_mode=pl.Buffered(1))
    except Exception:
        return pl.BlockSpec(block_shape, index_map)


def dff_patch_embeddings(topological_features, weight, bias, patch_size,
                         *, use_pallas=None, compute_dtype=jnp.bfloat16,
                         out_dtype=None):
    """JAX/Pallas equivalent of DFFPatchEmbeddings.forward.

    topological_features: (B, C, H, W)   (NCHW, same as PyTorch)
    weight: (hidden, C, ph, pw)          (same layout as nn.Conv2d.weight)
    bias:   (hidden,)
    returns: (B, num_patches, hidden)

    compute_dtype=jnp.float32 is the parity-validation escape hatch; the
    default bf16 is the MXU-native / HBM-friendly choice.  Pass
    out_dtype=jnp.bfloat16 when the downstream transformer is bf16 to halve
    output writeback bytes.
    """
    B, C, H, W = topological_features.shape
    hidden = weight.shape[0]
    ph, pw = patch_size
    if C != weight.shape[1]:
        raise ValueError("channel dimension of the topological features does "
                         "not match the projection weight")
    if H % ph != 0 or W % pw != 0:
        raise ValueError("image size must be divisible by patch size")
    nph, npw = H // ph, W // pw
    num_patches = nph * npw
    K = C * ph * pw
    M = B * num_patches
    if out_dtype is None:
        out_dtype = topological_features.dtype

    # Auto-dispatch: tiny problems are pure launch/DMA overhead in a custom
    # kernel and badly underfill the MXU -- let XLA fuse them instead.
    if use_pallas is None:
        use_pallas = (M >= 1024) and (hidden >= 128)

    # ---- im2col for a stride==kernel conv (exact, no overlap) ----
    # Cast to the compute dtype first so the rearrangement moves half the bytes;
    # allow_input_fusion below lets XLA fuse this transpose into the Pallas
    # operand-0 DMA instead of an extra HBM round trip.
    x = topological_features.astype(compute_dtype)
    x = x.reshape(B, C, nph, ph, npw, pw)
    x = jnp.transpose(x, (0, 2, 4, 1, 3, 5))          # (B, nph, npw, C, ph, pw)
    x_patches = x.reshape(M, K)

    # Conv2d weight (hidden, C, ph, pw) -> (K, hidden); flatten order (c, kh, kw)
    # matches the patch flatten order above.  Bias stays f32 (f32 accumulate).
    w_mat = weight.reshape(hidden, K).T.astype(compute_dtype)
    b_mat = bias.reshape(1, hidden).astype(jnp.float32)

    if not use_pallas:
        out = (jnp.dot(x_patches, w_mat, preferred_element_type=jnp.float32)
               + b_mat)
        return out.astype(out_dtype).reshape(B, num_patches, hidden)

    # ---- padding policy ----
    # K: pad to a multiple of 128 (zero columns are numerically exact) so the X
    # block's lane dim and the bf16 weight's sublane dim are dense.
    k_pad = _round_up(K, 128)
    if k_pad != K:
        x_patches = jnp.pad(x_patches, ((0, 0), (0, k_pad - K)))
        w_mat = jnp.pad(w_mat, ((0, k_pad - K), (0, 0)))
    # hidden: only lane-pad when the relative waste is small; for tiny hidden
    # the extra writeback + post-kernel slice copy costs more than the masked
    # stores it avoids (tiny hidden normally routes to the XLA path anyway).
    if hidden % 128 == 0:
        n_pad = hidden
    elif hidden >= 256:
        n_pad = _round_up(hidden, 128)
    else:
        n_pad = hidden   # block last dim == full array dim is legal (masked vst)
    if n_pad != hidden:
        w_mat = jnp.pad(w_mat, ((0, 0), (0, n_pad - hidden)))
        b_mat = jnp.pad(b_mat, ((0, 0), (0, n_pad - hidden)))

    in_bytes = jnp.dtype(compute_dtype).itemsize
    out_bytes = jnp.dtype(out_dtype).itemsize
    vmem_limit, vmem_budget = _vmem_limits()
    tm = _choose_row_tile(M, k_pad, n_pad, in_bytes, out_bytes, vmem_budget)
    grid = (pl.cdiv(M, tm),)

    # NOTE: for extremely large K*n_pad (resident weight approaching the VMEM
    # budget), a K-reduction grid axis ("arbitrary", f32 acc scratch, pl.when
    # init/finalize) should replace the full-K blocks; DFF configs keep
    # K*hidden far below that.
    out = pl.pallas_call(
        _patch_embed_kernel,
        out_shape=jax.ShapeDtypeStruct((M, n_pad), out_dtype),
        grid_spec=pltpu.PrefetchScalarGridSpec(
            num_scalar_prefetch=0,
            grid=grid,
            in_specs=[
                pl.BlockSpec((tm, k_pad), lambda i: (i, 0)),        # X row tile
                _resident_spec((k_pad, n_pad), lambda i: (0, 0)),   # weight, 1x buf
                _resident_spec((1, n_pad), lambda i: (0, 0)),       # bias, 1x buf
            ],
            out_specs=pl.BlockSpec((tm, n_pad), lambda i: (i, 0)),
        ),
        compiler_params=pltpu.CompilerParams(
            dimension_semantics=("parallel",),
            vmem_limit_bytes=vmem_limit,
            # Let XLA fuse the im2col cast+transpose(+K pad) producer into the
            # operand-0 DMA so x_patches is never materialized in HBM.
            # TODO(synk): confirm with xprof/HLO that the fusion fires; if not,
            # read NCHW slabs directly and rearrange in-kernel on the XLU.
            allow_input_fusion=[True, False, False],
        ),
    )(x_patches, w_mat, b_mat)

    if n_pad != hidden:
        out = out[:, :hidden]
    return out.reshape(B, num_patches, hidden)


if __name__ == "__main__":
    # Config consistent with the module: image_size=16, patch_size=8,
    # num_channels=4, hidden_size=32  ->  num_patches = 4 per image.
    B, C, H, W = 2, 4, 16, 16
    ph = pw = 8
    hidden = 32

    key = jax.random.PRNGKey(0)
    k_x, k_w, k_b = jax.random.split(key, 3)
    x = jax.random.normal(k_x, (B, C, H, W), dtype=jnp.float32)
    weight = jax.random.normal(k_w, (hidden, C, ph, pw), dtype=jnp.float32) * 0.02
    bias = jax.random.normal(k_b, (hidden,), dtype=jnp.float32) * 0.02

    # jit so the patch gather / pad / slice live in the same XLA computation as
    # the pallas_call (required for allow_input_fusion to have any effect).
    # Force the Pallas path at this tiny shape so the kernel itself is
    # exercised (the auto-dispatch would route M=8 / hidden=32 to XLA).
    fwd = jax.jit(dff_patch_embeddings,
                  static_argnames=("patch_size", "use_pallas"))
    out = jax.block_until_ready(
        fwd(x, weight, bias, patch_size=(ph, pw), use_pallas=True))

    # Reference in plain f32 JAX (conv-as-patch-matmul), matching the PyTorch op.
    nph, npw = H // ph, W // pw
    xp = jnp.transpose(x.reshape(B, C, nph, ph, npw, pw), (0, 2, 4, 1, 3, 5))
    xp = xp.reshape(B * nph * npw, C * ph * pw)
    ref = (xp @ weight.reshape(hidden, -1).T + bias).reshape(B, nph * npw, hidden)

    assert out.shape == (B, nph * npw, hidden), out.shape
    # bf16 operands with f32 accumulation -> loosened tolerance vs. f32 reference
    assert jnp.allclose(out, ref, atol=2e-2, rtol=2e-2), \
        float(jnp.max(jnp.abs(out - ref)))

    print("KERNEL_OK")
</pallas_src>

<mosaic_0001>
module attributes {stable_mosaic.version = 11 : i64} {
  func.func @_patch_embed_kernel(%arg0: i32, %arg1: memref<8x256xbf16, #tpu.memory_space<vmem>>, %arg2: memref<256x32xbf16, #tpu.memory_space<vmem>>, %arg3: memref<1x32xf32, #tpu.memory_space<vmem>>, %arg4: memref<8x32xf32, #tpu.memory_space<vmem>>) attributes {dimension_semantics = [#tpu.dimension_semantics<parallel>], iteration_bounds = array<i64: 1>, scalar_prefetch = 0 : i64, scratch_operands = 0 : i64, tpu.core_type = #tpu.core_type<tc>, window_params = [{transform_indices = @transform_0, window_bounds = array<i64: 8, 256>}, {pipeline_mode = #tpu.pipeline_mode<synchronous>, transform_indices = @transform_1, window_bounds = array<i64: 256, 32>}, {pipeline_mode = #tpu.pipeline_mode<synchronous>, transform_indices = @transform_2, window_bounds = array<i64: 1, 32>}, {transform_indices = @transform_3, window_bounds = array<i64: 8, 32>}]} {
    %c0 = arith.constant 0 : index
    %c0_0 = arith.constant 0 : index
    %0 = vector.load %arg1[%c0, %c0_0] : memref<8x256xbf16, #tpu.memory_space<vmem>>, vector<8x256xbf16>
    %c0_1 = arith.constant 0 : index
    %c0_2 = arith.constant 0 : index
    %1 = vector.load %arg2[%c0_1, %c0_2] : memref<256x32xbf16, #tpu.memory_space<vmem>>, vector<256x32xbf16>
    %cst = arith.constant dense<0.000000e+00> : vector<8x32xf32>
    %2 = tpu.matmul %0, %1, %cst {dimension_numbers = #tpu.dot_dimension_numbers<[1], [0], [0], [1], [0, 0, 1, 1], [], []>} : vector<8x256xbf16>, vector<256x32xbf16>, vector<8x32xf32> -> vector<8x32xf32>
    %c0_3 = arith.constant 0 : index
    %c0_4 = arith.constant 0 : index
    %3 = vector.load %arg3[%c0_3, %c0_4] : memref<1x32xf32, #tpu.memory_space<vmem>>, vector<1x32xf32>
    %4 = vector.broadcast %3 : vector<1x32xf32> to vector<8x32xf32>
    %5 = arith.addf %2, %4 : vector<8x32xf32>
    %c0_5 = arith.constant 0 : index
    %c0_6 = arith.constant 0 : index
    %6 = vector.load %arg4[%c0_5, %c0_6] : memref<8x32xf32, #tpu.memory_space<vmem>>, vector<8x32xf32>
    tpu.vector_store %arg4[%c0_5, %c0_6], %5 {strides = array<i32>} : memref<8x32xf32, #tpu.memory_space<vmem>>, vector<8x32xf32>,
    return
  }
  func.func @transform_0(%arg0: i32) -> (i32, i32) {
    %c0_i32 = arith.constant 0 : i32
    %c0_i32_0 = arith.constant 0 : i32
    return %arg0, %c0_i32 : i32, i32
  }
  func.func @transform_1(%arg0: i32) -> (i32, i32) {
    %c0_i32 = arith.constant 0 : i32
    %c0_i32_0 = arith.constant 0 : i32
    %c0_i32_1 = arith.constant 0 : i32
    return %c0_i32, %c0_i32_0 : i32, i32
  }
  func.func @transform_2(%arg0: i32) -> (i32, i32) {
    %c0_i32 = arith.constant 0 : i32
    %c0_i32_0 = arith.constant 0 : i32
    %c0_i32_1 = arith.constant 0 : i32
    return %c0_i32, %c0_i32_0 : i32, i32
  }
  func.func @transform_3(%arg0: i32) -> (i32, i32) {
    %c0_i32 = arith.constant 0 : i32
    %c0_i32_0 = arith.constant 0 : i32
    return %arg0, %c0_i32 : i32, i32
  }
}

</mosaic_0001>

<llo_original>
// kernel: dff_patch_embeddings.1
$region0: #{dff_patch_embeddings.1}
  #allocation0 [shape = 'u32[]', space=smem, size = 0x4, offset = 0x4, fixed_abs, tag = 'smem constant byte address 0x4 - core index']
  #allocation1 [shape = 'u32[72,128]{1,0:T(1,128)}', space=vmem, size = 0x9000, scoped, tag = 'internal scratch']
  %s0 = inlined_call_operand.vmem [shape: bf16[8,256], index: 0, kind: input, shape index: {}]
  %s1 = inlined_call_operand.vmem [shape: bf16[256,32], index: 1, kind: input, shape index: {}]
  %s2 = inlined_call_operand.vmem [shape: f32[1,32], index: 2, kind: input, shape index: {}]
  %s3 = inlined_call_operand.hbm [shape: f32[8,32], index: 3, kind: output, shape index: {}]
  %s4 = sld [smem:[#allocation0]]
  $region22: #{dff_patch_embeddings.1} parent=0
    _
  %s6 = ssub.s32 1, %s4
  %s7 = scalar_select 0, %s6, %s4
  $region1: #{dff_patch_embeddings.1} parent=0
    #allocation2 [shape = 'u8[4096]{0}', space=vmem, size = 0x1000, scoped, tag = 'output window, operand 0, single buffered']
    #allocation3 [shape = 's32[1]{0}', space=sflag, size = 0x4, scoped, tag = 'scoped memory for dff_patch_embeddings.1']
    %8 = vsyncpa [#allocation3], 0
    // Predicated region
    $region2: #{dff_patch_embeddings.1} parent=1 // pred_check
      _
    $region3: #{dff_patch_embeddings.1} parent=1 // pred_check_branch
      %10 = sbr.rel (0) target = $region5
    $region4: #{dff_patch_embeddings.1} parent=1 // pred_region
      _
    $region5: #{dff_patch_embeddings.1} parent=1 // pred_fallthru
      _
    // Predicated region
    $region6: #{dff_patch_embeddings.1} parent=1 // pred_check
      _
    $region7: #{dff_patch_embeddings.1} parent=1 // pred_check_branch
      %12 = sbr.rel (0) target = $region9
    $region8: #{dff_patch_embeddings.1} parent=1 // pred_region
      _
    $region9: #{dff_patch_embeddings.1} parent=1 // pred_fallthru
      _
    // Predicated region
    $region10: #{dff_patch_embeddings.1} parent=1 // pred_check
      _
    $region11: #{dff_patch_embeddings.1} parent=1 // pred_check_branch
      %14 = sbr.rel (0) target = $region13
    $region12: #{dff_patch_embeddings.1} parent=1 // pred_region
      _
    $region13: #{dff_patch_embeddings.1} parent=1 // pred_fallthru
      _
    %v15 = vld [vmem:[%s0] sm:$0xff]
    %v16 = vld [vmem:[%s1] sm:$0xf]
    %v17 = vld [vmem:[%s1 + $0x4] sm:$0xf]
    %v18 = vld [vmem:[%s1 + $0x8] sm:$0xf]
    %v19 = vld [vmem:[%s1 + $0xc] sm:$0xf]
    %v20 = vld [vmem:[%s1 + $0x10] sm:$0xf]
    %v21 = vld [vmem:[%s1 + $0x14] sm:$0xf]
    %v22 = vld [vmem:[%s1 + $0x18] sm:$0xf]
    %v23 = vld [vmem:[%s1 + $0x1c] sm:$0xf]
    %v24 = vld [vmem:[%s1 + $0x20] sm:$0xf]
    %v25 = vld [vmem:[%s1 + $0x24] sm:$0xf]
    %v26 = vld [vmem:[%s1 + $0x28] sm:$0xf]
    %v27 = vld [vmem:[%s1 + $0x2c] sm:$0xf]
    %v28 = vld [vmem:[%s1 + $0x30] sm:$0xf]
    %v29 = vld [vmem:[%s1 + $0x34] sm:$0xf]
    %v30 = vld [vmem:[%s1 + $0x38] sm:$0xf]
    %v31 = vld [vmem:[%s1 + $0x3c] sm:$0xf]
    %v32 = vld [vmem:[%s1 + $0x40] sm:$0xf]
    %v33 = vld [vmem:[%s1 + $0x44] sm:$0xf]
    %v34 = vld [vmem:[%s1 + $0x48] sm:$0xf]
    %v35 = vld [vmem:[%s1 + $0x4c] sm:$0xf]
    %v36 = vld [vmem:[%s1 + $0x50] sm:$0xf]
    %v37 = vld [vmem:[%s1 + $0x54] sm:$0xf]
    %v38 = vld [vmem:[%s1 + $0x58] sm:$0xf]
    %v39 = vld [vmem:[%s1 + $0x5c] sm:$0xf]
    %v40 = vld [vmem:[%s1 + $0x60] sm:$0xf]
    %v41 = vld [vmem:[%s1 + $0x64] sm:$0xf]
    %v42 = vld [vmem:[%s1 + $0x68] sm:$0xf]
    %v43 = vld [vmem:[%s1 + $0x6c] sm:$0xf]
    %v44 = vld [vmem:[%s1 + $0x70] sm:$0xf]
    %v45 = vld [vmem:[%s1 + $0x74] sm:$0xf]
    %v46 = vld [vmem:[%s1 + $0x78] sm:$0xf]
    %v47 = vld [vmem:[%s1 + $0x7c] sm:$0xf]
    %v48 = vld [vmem:[%s2] sm:$0x1]
    %v50 = vperm.slane %v48, 0
    %v53 = vunpack.c.l.b16 %v15
    %v54 = vunpack.c.h.b16 %v15
    %v55 = vpack.c.b16 %v53, %v53
    %v56 = vpack.c.b16 %v54, %v54
    %v91 = vunpack.c.l.b16 %v16
    %v92 = vunpack.c.l.b16 %v17
    %v93 = vunpack.c.l.b16 %v18
    %v94 = vunpack.c.l.b16 %v19
    %v95 = vunpack.c.l.b16 %v20
    %v96 = vunpack.c.l.b16 %v21
    %v97 = vunpack.c.l.b16 %v22
    %v98 = vunpack.c.l.b16 %v23
    %v99 = vunpack.c.l.b16 %v24
    %v100 = vunpack.c.l.b16 %v25
    %v101 = vunpack.c.l.b16 %v26
    %v102 = vunpack.c.l.b16 %v27
    %v103 = vunpack.c.l.b16 %v28
    %v104 = vunpack.c.l.b16 %v29
    %v105 = vunpack.c.l.b16 %v30
    %v106 = vunpack.c.l.b16 %v31
    %v107 = vunpack.c.l.b16 %v32
    %v108 = vunpack.c.l.b16 %v33
    %v109 = vunpack.c.l.b16 %v34
    %v110 = vunpack.c.l.b16 %v35
    %v111 = vunpack.c.l.b16 %v36
    %v112 = vunpack.c.l.b16 %v37
    %v113 = vunpack.c.l.b16 %v38
    %v114 = vunpack.c.l.b16 %v39
    %v115 = vunpack.c.l.b16 %v40
    %v116 = vunpack.c.l.b16 %v41
    %v117 = vunpack.c.l.b16 %v42
    %v118 = vunpack.c.l.b16 %v43
    %v119 = vunpack.c.l.b16 %v44
    %v120 = vunpack.c.l.b16 %v45
    %v121 = vunpack.c.l.b16 %v46
    %v122 = vunpack.c.l.b16 %v47
    %v123 = vpack.c.b16 %v92, %v91
    %v124 = vpack.c.b16 %v94, %v93
    %v125 = vpack.c.b16 %v96, %v95
    %v126 = vpack.c.b16 %v98, %v97
    %v127 = vpack.c.b16 %v100, %v99
    %v128 = vpack.c.b16 %v102, %v101
    %v129 = vpack.c.b16 %v104, %v103
    %v130 = vpack.c.b16 %v106, %v105
    %v131 = vpack.c.b16 %v108, %v107
    %v132 = vpack.c.b16 %v110, %v109
    %v133 = vpack.c.b16 %v112, %v111
    %v134 = vpack.c.b16 %v114, %v113
    %v135 = vpack.c.b16 %v116, %v115
    %v136 = vpack.c.b16 %v118, %v117
    %v137 = vpack.c.b16 %v120, %v119
    %v138 = vpack.c.b16 %v122, %v121
    %155 = vmatpush.bf16.msra.mxu0 %v130
    %156 = vmatpush.bf16.msra.mxu0 %v129
    %157 = vmatpush.bf16.msra.mxu0 %v128
    %158 = vmatpush.bf16.msra.mxu0 %v127
    %159 = vmatpush.bf16.msra.mxu0 %v126
    %160 = vmatpush.bf16.msra.mxu0 %v125
    %161 = vmatpush.bf16.msra.mxu0 %v124
    %162 = vmatpush.bf16.msra.mxu0 %v123
    %163 = vmatmul.bf16.gmra.mxu0 %v55
    %v164 = vpop.f32.mrf.mxu0
    %v165 = vadd.f32 %v50, %v164
    %v166 = vpop.f32.mrf.mxu0
    %167 = vdwg.mxu0
    %168 = vmatpush.bf16.msra.mxu0 %v138
    %169 = vmatpush.bf16.msra.mxu0 %v137
    %170 = vmatpush.bf16.msra.mxu0 %v136
    %171 = vmatpush.bf16.msra.mxu0 %v135
    %172 = vmatpush.bf16.msra.mxu0 %v134
    %173 = vmatpush.bf16.msra.mxu0 %v133
    %174 = vmatpush.bf16.msra.mxu0 %v132
    %175 = vmatpush.bf16.msra.mxu0 %v131
    %176 = vmatmul.bf16.gmra.mxu0 %v56
    %v177 = vpop.f32.mrf.mxu0
    %v178 = vadd.f32 %v165, %v177
    %v179 = vpop.f32.mrf.mxu0
    %180 = vdwg.mxu0
    %vm181 = vcmask 261120
    %182 = vst.msk [vmem:[#allocation2] sm:$0xff] %vm181, %v178
    // Predicated region
    $region14: #{dff_patch_embeddings.1} parent=1 // pred_check
      _
    $region15: #{dff_patch_embeddings.1} parent=1 // pred_check_branch
      %184 = sbr.rel (0) target = $region17
    $region16: #{dff_patch_embeddings.1} parent=1 // pred_region
      %186 = vsyncadd [#allocation3], 0
      %s188 = sshll.u32 [#allocation2], 4
      %s189 = int_to_ptr.vmem [resolvable:$true] %s188
      %s190 = sshll.u32 %s3, 4
      %s191 = int_to_ptr.hbm [resolvable:$true] %s190
      %193 = dma.vmem_to_hbm [thread:$0]  %s189, 128, %s191, [#allocation3]
    $region17: #{dff_patch_embeddings.1} parent=1 // pred_fallthru
      _
    // Predicated region
    $region18: #{dff_patch_embeddings.1} parent=1 // pred_check
      _
    $region19: #{dff_patch_embeddings.1} parent=1 // pred_check_branch
      %195 = sbr.rel (0) target = $region21
    $region20: #{dff_patch_embeddings.1} parent=1 // pred_region
      %197 = dma.done [#allocation3], 128
    $region21: #{dff_patch_embeddings.1} parent=1 // pred_fallthru
      _
    %198 = vsyncpa [#allocation3], 1

</llo_original>
